<compile_context>
chip_gen: v6e
topology: v6e:2x2x1
jax: 0.10.0
libtpu: 0.0.40
codegen_flags: <defaults>
</compile_context>

<pallas_src>
import functools

import jax
import jax.numpy as jnp
import numpy as np
from jax.experimental import pallas as pl
from jax.experimental.pallas import tpu as pltpu

EPS = 1e-5  # nn.BatchNorm2d default eps


def _round_up(x, m):
    return ((x + m - 1) // m) * m


def _conv_stats_kernel(xi_ref, w_ref, sum_ref, ssq_ref):
    # xi_ref:  [Kp, TM]    bf16  transposed im2col tile (pixels in lanes)
    # w_ref:   [Co, Kp]    bf16  folded conv weight (channels in sublanes)
    # sum_ref: [1, Co, 1]  f32   per-tile partial sum over pixels
    # ssq_ref: [1, Co, 1]  f32   per-tile partial sum of squares
    acc = jnp.dot(w_ref[...], xi_ref[...],
                  preferred_element_type=jnp.float32)        # [Co, TM] f32
    sum_ref[0] = jnp.sum(acc, axis=1, keepdims=True)          # [Co, 1]
    ssq_ref[0] = jnp.sum(acc * acc, axis=1, keepdims=True)    # [Co, 1]


def _norm_relu_kernel(xi_ref, w2_ref, shift_ref, o_ref):
    # Recompute the (memory-cheap) conv tile instead of round-tripping a
    # [Co, M] f32 intermediate through HBM.  BN scale is pre-folded into
    # w2_ref, so the epilogue is a per-channel (sublane) shift + ReLU.
    acc = jnp.dot(w2_ref[...], xi_ref[...],
                  preferred_element_type=jnp.float32)         # [Co, TM] f32
    o_ref[...] = jnp.maximum(acc + shift_ref[...], 0.0).astype(o_ref.dtype)


@functools.partial(jax.jit, static_argnames=("tile_m",))
def rootblock_forward(x_nchw, weight, gamma, beta, *, tile_m=2048):
    """x_nchw: [N, Cin, H, W]; weight: [Cout, Cin, 3, 3] (PyTorch OIHW)."""
    N, Cin, H, W = x_nchw.shape
    Cout = weight.shape[0]
    M = N * H * W
    K = 9 * Cin
    Kp = _round_up(K, 32)       # contraction dim, bf16 sublane aligned
    Co = _round_up(Cout, 16)    # output channels live in sublanes (bf16 packing)
    assert tile_m % 128 == 0, "tile_m must be lane-aligned (multiple of 128)"

    nt = -(-M // tile_m)
    if nt > 1 and nt % 2 == 1:
        nt += 1                 # even grid length -> clean v7x megacore split
    Mp = nt * tile_m            # zero-column padding is stats-neutral

    # --- layout plumbing (XLA): padded NCHW -> transposed im2col [Kp, Mp] bf16 ---
    xb = x_nchw.astype(jnp.bfloat16)
    xp = jnp.pad(xb, ((0, 0), (0, 0), (1, 1), (1, 1)))        # [N, Cin, H+2, W+2]
    taps = [xp[:, :, ky:ky + H, kx:kx + W]                     # [N, Cin, H, W]
            for ky in range(3) for kx in range(3)]
    xi = jnp.stack(taps, axis=0)                               # [9, N, Cin, H, W]
    xi = jnp.transpose(xi, (0, 2, 1, 3, 4)).reshape(K, M)      # [(ky,kx,ci), (n,y,x)]
    xi = jnp.pad(xi, ((0, Kp - K), (0, Mp - M)))               # [Kp, Mp] bf16

    # OIHW -> [cout, (ky,kx,cin)], zero-padded to [Co, Kp].
    w_f32 = jnp.transpose(weight.astype(jnp.float32), (0, 2, 3, 1)).reshape(Cout, K)
    w_f32 = jnp.pad(w_f32, ((0, Co - Cout), (0, Kp - K)))
    w_bf16 = w_f32.astype(jnp.bfloat16)

    cparams = pltpu.CompilerParams(
        dimension_semantics=("parallel",),
        vmem_limit_bytes=32 * 1024 * 1024)

    # --- pass 1: conv tile + per-tile BN partial statistics (megacore-safe) ---
    sums, ssqs = pl.pallas_call(
        _conv_stats_kernel,
        grid=(nt,),
        in_specs=[pl.BlockSpec((Kp, tile_m), lambda i: (0, i)),
                  pl.BlockSpec((Co, Kp), lambda i: (0, 0))],
        out_specs=[pl.BlockSpec((1, Co, 1), lambda i: (i, 0, 0)),
                   pl.BlockSpec((1, Co, 1), lambda i: (i, 0, 0))],
        out_shape=(jax.ShapeDtypeStruct((nt, Co, 1), jnp.float32),
                   jax.ShapeDtypeStruct((nt, Co, 1), jnp.float32)),
        compiler_params=cparams,
        cost_estimate=pl.CostEstimate(
            flops=2 * Mp * Kp * Co + 3 * Mp * Co,
            transcendentals=0,
            bytes_accessed=xi.size * 2 + w_bf16.size * 2 + 2 * nt * Co * 4),
    )(xi, w_bf16)

    # --- tiny JAX finalize: fold BN scale into the conv weight ---
    total = jnp.sum(sums[:, :, 0], axis=0)                    # [Co]
    total_sq = jnp.sum(ssqs[:, :, 0], axis=0)                 # [Co]
    mean = total / M                                           # divide by true M
    # TODO(synk): E[x^2]-mean^2 can cancel for very large M; a Chan-style
    # centered per-tile merge would be safer at scale.
    var = jnp.maximum(total_sq / M - mean * mean, 0.0)         # biased var (train norm)
    inv_std = jax.lax.rsqrt(var + EPS)
    gamma_p = jnp.pad(gamma.astype(jnp.float32), (0, Co - Cout))
    beta_p = jnp.pad(beta.astype(jnp.float32), (0, Co - Cout))
    scale_v = gamma_p * inv_std                                # [Co]
    shift = (beta_p - mean * scale_v).reshape(Co, 1)           # [Co, 1] f32
    w2 = (w_f32 * scale_v[:, None]).astype(jnp.bfloat16)       # BN scale folded in

    # --- pass 2: conv (recomputed) + shift + ReLU, lean bf16 [Co, Mp] output ---
    out = pl.pallas_call(
        _norm_relu_kernel,
        grid=(nt,),
        in_specs=[pl.BlockSpec((Kp, tile_m), lambda i: (0, i)),
                  pl.BlockSpec((Co, Kp), lambda i: (0, 0)),
                  pl.BlockSpec((Co, 1), lambda i: (0, 0))],
        out_specs=pl.BlockSpec((Co, tile_m), lambda i: (0, i)),
        out_shape=jax.ShapeDtypeStruct((Co, Mp), jnp.bfloat16),
        compiler_params=cparams,
        cost_estimate=pl.CostEstimate(
            flops=2 * Mp * Kp * Co + 2 * Mp * Co,
            transcendentals=0,
            bytes_accessed=xi.size * 2 + w2.size * 2 + Co * 4 + Co * Mp * 2),
    )(xi, w2, shift)

    # [Co, Mp] -> [Cout, M] -> [Cout, N, H, W] -> leading-axis permute to NCHW,
    # casting back to f32 in the same XLA copy to keep the module's f32 output.
    out = out[:Cout, :M].reshape(Cout, N, H, W)
    return jnp.transpose(out, (1, 0, 2, 3)).astype(jnp.float32)


def rootblock_reference(x_nchw, weight, gamma, beta):
    """Pure-JAX f32 reference matching PyTorch Rootblock.forward in train mode."""
    y = jax.lax.conv_general_dilated(
        x_nchw.astype(jnp.float32), weight.astype(jnp.float32),
        window_strides=(1, 1), padding=((1, 1), (1, 1)),
        dimension_numbers=('NCHW', 'OIHW', 'NCHW'))
    mean = jnp.mean(y, axis=(0, 2, 3), keepdims=True)
    var = jnp.mean((y - mean) ** 2, axis=(0, 2, 3), keepdims=True)
    yn = (y - mean) * jax.lax.rsqrt(var + EPS)
    yn = yn * gamma.reshape(1, -1, 1, 1) + beta.reshape(1, -1, 1, 1)
    return jnp.maximum(yn, 0.0)


if __name__ == "__main__":
    # Small deterministic shapes matching the module defaults (cin=3, cout=64).
    N, Cin, Cout, H, W = 2, 3, 64, 16, 16
    key = jax.random.PRNGKey(0)
    kx, kw, kg, kb = jax.random.split(key, 4)

    x = jax.random.normal(kx, (N, Cin, H, W), dtype=jnp.float32)
    # Kaiming-ish deterministic conv weight init (NormConv2d(cin, cout, 3)).
    w_std = (2.0 / (Cin * 3 * 3)) ** 0.5
    weight = jax.random.normal(kw, (Cout, Cin, 3, 3), dtype=jnp.float32) * w_std
    # BatchNorm affine params (nontrivial but deterministic).
    gamma = 1.0 + 0.5 * jax.random.normal(kg, (Cout,), dtype=jnp.float32)
    beta = 0.1 * jax.random.normal(kb, (Cout,), dtype=jnp.float32)

    # Toy M = 2*16*16 = 512: tile_m=256 gives an even 2-step grid so the
    # pipelined path is exercised; the production default is tile_m=2048.
    out = jax.block_until_ready(
        rootblock_forward(x, weight, gamma, beta, tile_m=256))
    ref = jax.block_until_ready(rootblock_reference(x, weight, gamma, beta))

    np.testing.assert_allclose(np.asarray(out), np.asarray(ref),
                               rtol=2e-2, atol=2e-2)
    print("KERNEL_OK")
</pallas_src>

<mosaic_0001>
module attributes {stable_mosaic.version = 11 : i64} {
  func.func @_conv_stats_kernel(%arg0: i32, %arg1: memref<32x256xbf16, #tpu.memory_space<vmem>>, %arg2: memref<64x32xbf16, #tpu.memory_space<vmem>>, %arg3: memref<1x64x1xf32, #tpu.memory_space<vmem>>, %arg4: memref<1x64x1xf32, #tpu.memory_space<vmem>>) attributes {dimension_semantics = [#tpu.dimension_semantics<parallel>], iteration_bounds = array<i64: 2>, scalar_prefetch = 0 : i64, scratch_operands = 0 : i64, tpu.core_type = #tpu.core_type<tc>, window_params = [{transform_indices = @transform_0, window_bounds = array<i64: 32, 256>}, {pipeline_mode = #tpu.pipeline_mode<synchronous>, transform_indices = @transform_1, window_bounds = array<i64: 64, 32>}, {transform_indices = @transform_2, window_bounds = array<i64: 1, 64, 1>}, {transform_indices = @transform_3, window_bounds = array<i64: 1, 64, 1>}]} {
    %c0 = arith.constant 0 : index
    %c0_0 = arith.constant 0 : index
    %0 = vector.load %arg2[%c0, %c0_0] : memref<64x32xbf16, #tpu.memory_space<vmem>>, vector<64x32xbf16>
    %c0_1 = arith.constant 0 : index
    %c0_2 = arith.constant 0 : index
    %1 = vector.load %arg1[%c0_1, %c0_2] : memref<32x256xbf16, #tpu.memory_space<vmem>>, vector<32x256xbf16>
    %cst = arith.constant dense<0.000000e+00> : vector<64x256xf32>
    %2 = tpu.matmul %0, %1, %cst {dimension_numbers = #tpu.dot_dimension_numbers<[1], [0], [0], [1], [0, 0, 1, 1], [], []>} : vector<64x32xbf16>, vector<32x256xbf16>, vector<64x256xf32> -> vector<64x256xf32>
    %cst_3 = arith.constant dense<0.000000e+00> : vector<64xf32>
    %3 = vector.multi_reduction <add>, %2, %cst_3 [1] : vector<64x256xf32> to vector<64xf32>
    %4 = vector.shape_cast %3 : vector<64xf32> to vector<64x1xf32>
    %c0_4 = arith.constant 0 : index
    %c0_5 = arith.constant 0 : index
    %c0_6 = arith.constant 0 : index
    %5 = vector.load %arg3[%c0_4, %c0_5, %c0_6] : memref<1x64x1xf32, #tpu.memory_space<vmem>>, vector<1x64x1xf32>
    %6 = vector.shape_cast %5 : vector<1x64x1xf32> to vector<64x1xf32>
    %7 = vector.shape_cast %4 : vector<64x1xf32> to vector<1x64x1xf32>
    tpu.vector_store %arg3[%c0_4, %c0_5, %c0_6], %7 {strides = array<i32>} : memref<1x64x1xf32, #tpu.memory_space<vmem>>, vector<1x64x1xf32>,
    %8 = arith.mulf %2, %2 : vector<64x256xf32>
    %cst_7 = arith.constant dense<0.000000e+00> : vector<64xf32>
    %9 = vector.multi_reduction <add>, %8, %cst_7 [1] : vector<64x256xf32> to vector<64xf32>
    %10 = vector.shape_cast %9 : vector<64xf32> to vector<64x1xf32>
    %c0_8 = arith.constant 0 : index
    %c0_9 = arith.constant 0 : index
    %c0_10 = arith.constant 0 : index
    %11 = vector.load %arg4[%c0_8, %c0_9, %c0_10] : memref<1x64x1xf32, #tpu.memory_space<vmem>>, vector<1x64x1xf32>
    %12 = vector.shape_cast %11 : vector<1x64x1xf32> to vector<64x1xf32>
    %13 = vector.shape_cast %10 : vector<64x1xf32> to vector<1x64x1xf32>
    tpu.vector_store %arg4[%c0_8, %c0_9, %c0_10], %13 {strides = array<i32>} : memref<1x64x1xf32, #tpu.memory_space<vmem>>, vector<1x64x1xf32>,
    return
  }
  func.func @transform_0(%arg0: i32) -> (i32, i32) {
    %c0_i32 = arith.constant 0 : i32
    %c0_i32_0 = arith.constant 0 : i32
    return %c0_i32, %arg0 : i32, i32
  }
  func.func @transform_1(%arg0: i32) -> (i32, i32) {
    %c0_i32 = arith.constant 0 : i32
    %c0_i32_0 = arith.constant 0 : i32
    %c0_i32_1 = arith.constant 0 : i32
    return %c0_i32, %c0_i32_0 : i32, i32
  }
  func.func @transform_2(%arg0: i32) -> (i32, i32, i32) {
    %c0_i32 = arith.constant 0 : i32
    %c0_i32_0 = arith.constant 0 : i32
    %c0_i32_1 = arith.constant 0 : i32
    return %arg0, %c0_i32, %c0_i32_0 : i32, i32, i32
  }
  func.func @transform_3(%arg0: i32) -> (i32, i32, i32) {
    %c0_i32 = arith.constant 0 : i32
    %c0_i32_0 = arith.constant 0 : i32
    %c0_i32_1 = arith.constant 0 : i32
    return %arg0, %c0_i32, %c0_i32_0 : i32, i32, i32
  }
}

module attributes {stable_mosaic.version = 11 : i64} {
  func.func @_norm_relu_kernel(%arg0: i32, %arg1: memref<32x256xbf16, #tpu.memory_space<vmem>>, %arg2: memref<64x32xbf16, #tpu.memory_space<vmem>>, %arg3: memref<64x1xf32, #tpu.memory_space<vmem>>, %arg4: memref<64x256xbf16, #tpu.memory_space<vmem>>) attributes {dimension_semantics = [#tpu.dimension_semantics<parallel>], iteration_bounds = array<i64: 2>, scalar_prefetch = 0 : i64, scratch_operands = 0 : i64, tpu.core_type = #tpu.core_type<tc>, window_params = [{transform_indices = @transform_0, window_bounds = array<i64: 32, 256>}, {pipeline_mode = #tpu.pipeline_mode<synchronous>, transform_indices = @transform_1, window_bounds = array<i64: 64, 32>}, {pipeline_mode = #tpu.pipeline_mode<synchronous>, transform_indices = @transform_2, window_bounds = array<i64: 64, 1>}, {transform_indices = @transform_3, window_bounds = array<i64: 64, 256>}]} {
    %c0 = arith.constant 0 : index
    %c0_0 = arith.constant 0 : index
    %0 = vector.load %arg2[%c0, %c0_0] : memref<64x32xbf16, #tpu.memory_space<vmem>>, vector<64x32xbf16>
    %c0_1 = arith.constant 0 : index
    %c0_2 = arith.constant 0 : index
    %1 = vector.load %arg1[%c0_1, %c0_2] : memref<32x256xbf16, #tpu.memory_space<vmem>>, vector<32x256xbf16>
    %cst = arith.constant dense<0.000000e+00> : vector<64x256xf32>
    %2 = tpu.matmul %0, %1, %cst {dimension_numbers = #tpu.dot_dimension_numbers<[1], [0], [0], [1], [0, 0, 1, 1], [], []>} : vector<64x32xbf16>, vector<32x256xbf16>, vector<64x256xf32> -> vector<64x256xf32>
    %c0_3 = arith.constant 0 : index
    %c0_4 = arith.constant 0 : index
    %3 = vector.load %arg3[%c0_3, %c0_4] : memref<64x1xf32, #tpu.memory_space<vmem>>, vector<64x1xf32>
    %4 = vector.broadcast %3 : vector<64x1xf32> to vector<64x256xf32>
    %5 = arith.addf %2, %4 : vector<64x256xf32>
    %cst_5 = arith.constant 0.000000e+00 : f32
    %6 = vector.broadcast %cst_5 : f32 to vector<64x256xf32>
    %7 = arith.maximumf %5, %6 : vector<64x256xf32>
    %8 = arith.truncf %7 : vector<64x256xf32> to vector<64x256xbf16>
    %c0_6 = arith.constant 0 : index
    %c0_7 = arith.constant 0 : index
    %9 = vector.load %arg4[%c0_6, %c0_7] : memref<64x256xbf16, #tpu.memory_space<vmem>>, vector<64x256xbf16>
    tpu.vector_store %arg4[%c0_6, %c0_7], %8 {strides = array<i32>} : memref<64x256xbf16, #tpu.memory_space<vmem>>, vector<64x256xbf16>,
    return
  }
  func.func @transform_0(%arg0: i32) -> (i32, i32) {
    %c0_i32 = arith.constant 0 : i32
    %c0_i32_0 = arith.constant 0 : i32
    return %c0_i32, %arg0 : i32, i32
  }
  func.func @transform_1(%arg0: i32) -> (i32, i32) {
    %c0_i32 = arith.constant 0 : i32
    %c0_i32_0 = arith.constant 0 : i32
    %c0_i32_1 = arith.constant 0 : i32
    return %c0_i32, %c0_i32_0 : i32, i32
  }
  func.func @transform_2(%arg0: i32) -> (i32, i32) {
    %c0_i32 = arith.constant 0 : i32
    %c0_i32_0 = arith.constant 0 : i32
    %c0_i32_1 = arith.constant 0 : i32
    return %c0_i32, %c0_i32_0 : i32, i32
  }
  func.func @transform_3(%arg0: i32) -> (i32, i32) {
    %c0_i32 = arith.constant 0 : i32
    %c0_i32_0 = arith.constant 0 : i32
    return %c0_i32, %arg0 : i32, i32
  }
}

</mosaic_0001>

<llo_original>
// kernel: rootblock_forward.3
$region0: #{rootblock_forward.3}
  #allocation0 [shape = 'u32[]', space=smem, size = 0x4, offset = 0x4, fixed_abs, tag = 'smem constant byte address 0x4 - core index']
  #allocation1 [shape = 'u32[144,128]{1,0:T(1,128)}', space=vmem, size = 0x12000, scoped, tag = 'internal scratch']
  %s0 = inlined_call_operand.vmem [shape: bf16[32,512], index: 0, kind: input, shape index: {}]
  %s1 = inlined_call_operand.vmem [shape: bf16[64,32], index: 1, kind: input, shape index: {}]
  %s2 = inlined_call_operand.vmem [shape: f32[64,1], index: 2, kind: input, shape index: {}]
  %s3 = inlined_call_operand.vmem [shape: bf16[64,512], index: 3, kind: output, shape index: {}]
  %s4 = sld [smem:[#allocation0]]
  $region117: #{rootblock_forward.3} parent=0
    _
  %s6 = ssub.s32 1, %s4
  %s7 = scalar_select 0, %s6, %s4
  $region1: #{rootblock_forward.3} parent=0
    #allocation2 [shape = 'u8[32768]{0}', space=vmem, size = 0x8000, scoped, tag = 'input window, operand 0']
    #allocation3 [shape = 'u8[65536]{0}', space=vmem, size = 0x10000, scoped, tag = 'output window, operand 0']
    loop: start=0, step=1, limit=4
    $region2: #{rootblock_forward.3} parent=1 // loop_pre_header
      _
    $region3: #{rootblock_forward.3} parent=1 // loop_header
      %s9 = sphi 0, %s13
      %p10 = scmp.ge.s32.totalorder %s9, 4
      %s19 = sphi 0, %s21
      %s22 = sphi 0, %s19
      %s23 = sphi 0, %s22
      %s39 = sphi 0, %s23
      %s43 = sphi 0, %s43
      %s45 = sphi 0, %s43
      %s46 = sphi 0, %s45
      %s60 = sphi 0, %s46
      %s64 = sphi 0, %s64
      %s66 = sphi 0, %s64
      %s67 = sphi 0, %s66
      %s81 = sphi 0, %s67
      %s87 = sphi 0, %s89
      %s90 = sphi 0, %s87
      %s91 = sphi 0, %s90
      %s107 = sphi 0, %s91
    $region4: #{rootblock_forward.3} parent=1 // loop_header_branch
      %12 = sbr.rel (%p10) target = $region8
    $region5: #{rootblock_forward.3} parent=1 // loop_body
      %s14 = ssub.s32 %s9, 1
      %s15 = ssub.s32 %s9, 2
      %s16 = sadd.s32 %s9, 1
      %s17 = ssub.s32 %s9, %s16
      %p18 = scmp.eq.s32.totalorder %s17, 0
      %s20 = sadd.s32 %s19, 1
      %s21 = scalar_select %p18, %s19, %s20
      %p24 = pneg %p18
      %p25 = scmp.eq.s32.totalorder %s9, 1
      %p26 = por %p24, %p25
      %p27 = scmp.ne.s32.totalorder %s19, %s22
      %p28 = scmp.eq.s32.totalorder %s9, 0
      %p29 = por %p27, %p28
      %p30 = scmp.ne.s32.totalorder %s19, %s22
      %p31 = scmp.eq.s32.totalorder %s14, 1
      %p32 = por %p30, %p31
      %p33 = scmp.ne.s32.totalorder %s22, %s23
      %p34 = scmp.eq.s32.totalorder %s14, 0
      %p35 = por %p33, %p34
      %p36 = scmp.ne.s32.totalorder %s22, %s23
      %p37 = scmp.eq.s32.totalorder %s15, 1
      %p38 = por %p36, %p37
      %p40 = scmp.ne.s32.totalorder %s23, %s39
      %p41 = scmp.eq.s32.totalorder %s15, 0
      %p42 = por %p40, %p41
      %s44 = sadd.s32 %s43, 1
      %p47 = scmp.eq.s32.totalorder %s9, 1
      %p48 = scmp.ne.s32.totalorder %s43, %s45
      %p49 = scmp.eq.s32.totalorder %s9, 0
      %p50 = por %p48, %p49
      %p51 = scmp.ne.s32.totalorder %s43, %s45
      %p52 = scmp.eq.s32.totalorder %s14, 1
      %p53 = por %p51, %p52
      %p54 = scmp.ne.s32.totalorder %s45, %s46
      %p55 = scmp.eq.s32.totalorder %s14, 0
      %p56 = por %p54, %p55
      %p57 = scmp.ne.s32.totalorder %s45, %s46
      %p58 = scmp.eq.s32.totalorder %s15, 1
      %p59 = por %p57, %p58
      %p61 = scmp.ne.s32.totalorder %s46, %s60
      %p62 = scmp.eq.s32.totalorder %s15, 0
      %p63 = por %p61, %p62
      %s65 = sadd.s32 %s64, 1
      %p68 = scmp.eq.s32.totalorder %s9, 1
      %p69 = scmp.ne.s32.totalorder %s64, %s66
      %p70 = scmp.eq.s32.totalorder %s9, 0
      %p71 = por %p69, %p70
      %p72 = scmp.ne.s32.totalorder %s64, %s66
      %p73 = scmp.eq.s32.totalorder %s14, 1
      %p74 = por %p72, %p73
      %p75 = scmp.ne.s32.totalorder %s66, %s67
      %p76 = scmp.eq.s32.totalorder %s14, 0
      %p77 = por %p75, %p76
      %p78 = scmp.ne.s32.totalorder %s66, %s67
      %p79 = scmp.eq.s32.totalorder %s15, 1
      %p80 = por %p78, %p79
      %p82 = scmp.ne.s32.totalorder %s67, %s81
      %p83 = scmp.eq.s32.totalorder %s15, 0
      %p84 = por %p82, %p83
      %s85 = ssub.s32 %s9, %s16
      %p86 = scmp.eq.s32.totalorder %s85, 0
      %s88 = sadd.s32 %s87, 1
      %s89 = scalar_select %p86, %s87, %s88
      %p92 = pneg %p86
      %p93 = scmp.eq.s32.totalorder %s9, 1
      %p94 = por %p92, %p93
      %p95 = scmp.ne.s32.totalorder %s87, %s90
      %p96 = scmp.eq.s32.totalorder %s9, 0
      %p97 = por %p95, %p96
      %p98 = scmp.ne.s32.totalorder %s87, %s90
      %p99 = scmp.eq.s32.totalorder %s14, 1
      %p100 = por %p98, %p99
      %p101 = scmp.ne.s32.totalorder %s90, %s91
      %p102 = scmp.eq.s32.totalorder %s14, 0
      %p103 = por %p101, %p102
      %p104 = scmp.ne.s32.totalorder %s90, %s91
      %p105 = scmp.eq.s32.totalorder %s15, 1
      %p106 = por %p104, %p105
      %p108 = scmp.ne.s32.totalorder %s91, %s107
      %p109 = scmp.eq.s32.totalorder %s15, 0
      %p110 = por %p108, %p109
      %p111 = scmp.le.s32.totalorder 1, %s9
      %p112 = scmp.lt.s32.totalorder %s9, 3
      %p113 = pnand %p111, %p112
      %p114 = pneg %p113
      // Predicated region
      $region9: #{rootblock_forward.3} parent=5 // pred_check
        _
      $region10: #{rootblock_forward.3} parent=5 // pred_check_branch
        %116 = sbr.rel (%p113) target = $region12
      $region11: #{rootblock_forward.3} parent=5 // pred_region
        %s117 = ssub.s32 %s9, 1
        // Predicated region
        $region13: #{rootblock_forward.3} parent=11 // pred_check
          %p118 = pneg %p56
        $region14: #{rootblock_forward.3} parent=11 // pred_check_branch
          %120 = sbr.rel (%p118) target = $region16
        $region15: #{rootblock_forward.3} parent=11 // pred_region
          _
        $region16: #{rootblock_forward.3} parent=11 // pred_fallthru
          _
        // Predicated region
        $region17: #{rootblock_forward.3} parent=11 // pred_check
          %p121 = pneg %p77
        $region18: #{rootblock_forward.3} parent=11 // pred_check_branch
          %123 = sbr.rel (%p121) target = $region20
        $region19: #{rootblock_forward.3} parent=11 // pred_region
          _
        $region20: #{rootblock_forward.3} parent=11 // pred_fallthru
          _
      $region12: #{rootblock_forward.3} parent=5 // pred_fallthru
        _
      %p124 = scmp.lt.s32.totalorder %s9, 2
      // Predicated region
      $region21: #{rootblock_forward.3} parent=5 // pred_check
        %p125 = pneg %p124
      $region22: #{rootblock_forward.3} parent=5 // pred_check_branch
        %127 = sbr.rel (%p125) target = $region24
      $region23: #{rootblock_forward.3} parent=5 // pred_region
        // Predicated region
        $region25: #{rootblock_forward.3} parent=23 // pred_check
          %p128 = pneg %p29
        $region26: #{rootblock_forward.3} parent=23 // pred_check_branch
          %130 = sbr.rel (%p128) target = $region28
        $region27: #{rootblock_forward.3} parent=23 // pred_region
          %s131 = sand.u32 %s19, 1
          %s132 = sand.u32 %s19, 1
          %s133 = smul.addr %s132, 32
          %s134 = scalar_lea.vmem [#allocation2], %s133
          %s135 = smul.u32 2, %s9
          %s136 = smul.addr %s135, 4
          %s137 = scalar_lea.vmem %s0, %s136
          // Predicated region
          $region29: #{rootblock_forward.3} parent=27 // pred_check
            _
          $region30: #{rootblock_forward.3} parent=27 // pred_check_branch
            %139 = sbr.rel (0) target = $region32
          $region31: #{rootblock_forward.3} parent=27 // pred_region
            // Predicated region
            $region33: #{rootblock_forward.3} parent=31 // pred_check
              _
            $region34: #{rootblock_forward.3} parent=31 // pred_check_branch
              %141 = sbr.rel (0) target = $region36
            $region35: #{rootblock_forward.3} parent=31 // pred_region
              // Predicated region
              $region48: #{rootblock_forward.3} parent=35 // pred_check
                _
              $region49: #{rootblock_forward.3} parent=35 // pred_check_branch
                %163 = sbr.rel (0) target = $region51
              $region50: #{rootblock_forward.3} parent=35 // pred_region
                loop: start=0, step=1, limit=1
                $region52: #{rootblock_forward.3} parent=50 // loop_pre_header
                  _
                $region53: #{rootblock_forward.3} parent=50 // loop_header
                  %s165 = sphi 0, %s169
                  %p166 = scmp.ge.s32.totalorder %s165, 1
                  %s170 = sphi %s137, %s137
                  %s171 = sphi %s134, %s134
                $region54: #{rootblock_forward.3} parent=50 // loop_header_branch
                  %168 = sbr.rel (%p166) target = $region58
                $region55: #{rootblock_forward.3} parent=50 // loop_body
                  %v172 = vld [vmem:[%s170] sm:$0xff]
                  %173 = vst [vmem:[%s171] sm:$0xff] %v172
                  %v174 = vld [vmem:[%s170 + $0x10] sm:$0xff]
                  %175 = vst [vmem:[%s171 + $0x8] sm:$0xff] %v174
                  %v176 = vld [vmem:[%s170 + $0x20] sm:$0xff]
                  %177 = vst [vmem:[%s171 + $0x10] sm:$0xff] %v176
                  %v178 = vld [vmem:[%s170 + $0x30] sm:$0xff]
                  %179 = vst [vmem:[%s171 + $0x18] sm:$0xff] %v178
                $region56: #{rootblock_forward.3} parent=50 // loop_footer
                  %s169 = sadd.s32 1, %s165
                $region57: #{rootblock_forward.3} parent=50 // loop_footer_branch
                  %164 = sbr.rel target = $region53
                $region58: #{rootblock_forward.3} parent=50 // loop_exit
                  _
              $region51: #{rootblock_forward.3} parent=35 // pred_fallthru
                _
              // Predicated region
              $region59: #{rootblock_forward.3} parent=35 // pred_check
                _
              $region60: #{rootblock_forward.3} parent=35 // pred_check_branch
                %181 = sbr.rel target = $region62
              $region61: #{rootblock_forward.3} parent=35 // pred_region
                _
              $region62: #{rootblock_forward.3} parent=35 // pred_fallthru
                _
            $region36: #{rootblock_forward.3} parent=31 // pred_fallthru
              _
            // Predicated region
            $region37: #{rootblock_forward.3} parent=31 // pred_check
              _
            $region38: #{rootblock_forward.3} parent=31 // pred_check_branch
              %143 = sbr.rel target = $region40
            $region39: #{rootblock_forward.3} parent=31 // pred_region
              %s145 = ssub.s32 256, 1
              loop: start=0, step=1, limit=1
              $region41: #{rootblock_forward.3} parent=39 // loop_pre_header
                _
              $region42: #{rootblock_forward.3} parent=39 // loop_header
                %s147 = sphi 0, %s151
                %p148 = scmp.ge.s32.totalorder %s147, 1
                %s152 = sphi %s137, %s137
                %s153 = sphi %s134, %s134
              $region43: #{rootblock_forward.3} parent=39 // loop_header_branch
                %150 = sbr.rel (%p148) target = $region47
              $region44: #{rootblock_forward.3} parent=39 // loop_body
                %v154 = vld [vmem:[%s152] sm:%s145]
                %155 = vst [vmem:[%s153] sm:%s145] %v154
                %v156 = vld [vmem:[%s152 + $0x10] sm:%s145]
                %157 = vst [vmem:[%s153 + $0x8] sm:%s145] %v156
                %v158 = vld [vmem:[%s152 + $0x20] sm:%s145]
                %159 = vst [vmem:[%s153 + $0x10] sm:%s145] %v158
                %v160 = vld [vmem:[%s152 + $0x30] sm:%s145]
                %161 = vst [vmem:[%s153 + $0x18] sm:%s145] %v160
              $region45: #{rootblock_forward.3} parent=39 // loop_footer
                %s151 = sadd.s32 1, %s147
              $region46: #{rootblock_forward.3} parent=39 // loop_footer_branch
                %146 = sbr.rel target = $region42
              $region47: #{rootblock_forward.3} parent=39 // loop_exit
                _
            $region40: #{rootblock_forward.3} parent=31 // pred_fallthru
              _
          $region32: #{rootblock_forward.3} parent=27 // pred_fallthru
            _
          %182 = vnop
        $region28: #{rootblock_forward.3} parent=23 // pred_fallthru
          _
      $region24: #{rootblock_forward.3} parent=5 // pred_fallthru
        _
      %p183 = scmp.le.s32.totalorder 1, %s9
      %p184 = scmp.lt.s32.totalorder %s9, 3
      %p185 = pnand %p183, %p184
      %p186 = pneg %p185
      // Predicated region
      $region63: #{rootblock_forward.3} parent=5 // pred_check
        _
      $region64: #{rootblock_forward.3} parent=5 // pred_check_branch
        %188 = sbr.rel (%p185) target = $region66
      $region65: #{rootblock_forward.3} parent=5 // pred_region
        %s189 = ssub.s32 %s9, 1
        %s190 = sand.u32 %s22, 1
        %s191 = sand.u32 %s22, 1
        %s192 = smul.addr %s191, 32
        %s193 = scalar_lea.vmem [#allocation2], %s192
        // Predicated region
        $region67: #{rootblock_forward.3} parent=65 // pred_check
          %p194 = pneg %p35
        $region68: #{rootblock_forward.3} parent=65 // pred_check_branch
          %196 = sbr.rel (%p194) target = $region70
        $region69: #{rootblock_forward.3} parent=65 // pred_region
          _
        $region70: #{rootblock_forward.3} parent=65 // pred_fallthru
          _
        %s197 = sand.u32 %s22, 1
        %s198 = sand.u32 %s22, 1
        %s199 = smul.addr %s198, 32
        %s200 = scalar_lea.vmem [#allocation2], %s199
        %p201 = pneg %p35
        %p202 = pneg %p32
        %p203 = pneg %p56
        %p204 = pneg %p53
        %p205 = pneg %p77
        %p206 = pneg %p74
        %p207 = pneg %p103
        %p208 = pneg %p100
        %s209 = sand.u32 %s90, 1
        %s210 = sand.u32 %s90, 1
        %s211 = smul.addr %s210, 64
        %s212 = scalar_lea.vmem [#allocation3], %s211
        %s213 = smul.u32 2, %s14
        %s214 = smul.u32 2, %s14
        %v216 = vld [vmem:[%s1] sm:$0xf]
        %v217 = vld [vmem:[%s1 + $0x4] sm:$0xf]
        %v218 = vld [vmem:[%s1 + $0x8] sm:$0xf]
        %v219 = vld [vmem:[%s1 + $0xc] sm:$0xf]
        %v220 = vld [vmem:[%s1 + $0x10] sm:$0xf]
        %v221 = vld [vmem:[%s1 + $0x14] sm:$0xf]
        %v222 = vld [vmem:[%s1 + $0x18] sm:$0xf]
        %v223 = vld [vmem:[%s1 + $0x1c] sm:$0xf]
        %v224 = vld [vmem:[%s193] sm:$0xff]
        %v225 = vld [vmem:[%s193 + $0x8] sm:$0xff]
        %v226 = vld [vmem:[%s193 + $0x10] sm:$0xff]
        %v227 = vld [vmem:[%s193 + $0x18] sm:$0xff]
        %v228 = vld [vmem:[%s2] sm:$0xff]
        %v229 = vld [vmem:[%s2 + $0x8] sm:$0xff]
        %v230 = vld [vmem:[%s2 + $0x10] sm:$0xff]
        %v231 = vld [vmem:[%s2 + $0x18] sm:$0xff]
        %v232 = vld [vmem:[%s2 + $0x20] sm:$0xff]
        %v233 = vld [vmem:[%s2 + $0x28] sm:$0xff]
        %v234 = vld [vmem:[%s2 + $0x30] sm:$0xff]
        %v235 = vld [vmem:[%s2 + $0x38] sm:$0xff]
        %237 = vset.pattern.permute.xlu0 0
        %238 = vperm.xlu0 %237, %v228
        %v239 = vpop.permute.xlu0 %238
        %242 = vset.pattern.permute.xlu0 0
        %243 = vperm.xlu0 %242, %v229
        %v244 = vpop.permute.xlu0 %243
        %247 = vset.pattern.permute.xlu0 0
        %248 = vperm.xlu0 %247, %v230
        %v249 = vpop.permute.xlu0 %248
        %252 = vset.pattern.permute.xlu0 0
        %253 = vperm.xlu0 %252, %v231
        %v254 = vpop.permute.xlu0 %253
        %257 = vset.pattern.permute.xlu0 0
        %258 = vperm.xlu0 %257, %v232
        %v259 = vpop.permute.xlu0 %258
        %262 = vset.pattern.permute.xlu0 0
        %263 = vperm.xlu0 %262, %v233
        %v264 = vpop.permute.xlu0 %263
        %267 = vset.pattern.permute.xlu0 0
        %268 = vperm.xlu0 %267, %v234
        %v269 = vpop.permute.xlu0 %268
        %272 = vset.pattern.permute.xlu0 0
        %273 = vperm.xlu0 %272, %v235
        %v274 = vpop.permute.xlu0 %273
        %v284 = vunpack.c.l.b16 %v216
        %v285 = vunpack.c.l.b16 %v217
        %v286 = vunpack.c.l.b16 %v218
        %v287 = vunpack.c.l.b16 %v219
        %v288 = vunpack.c.l.b16 %v220
        %v289 = vunpack.c.l.b16 %v221
        %v290 = vunpack.c.l.b16 %v222
        %v291 = vunpack.c.l.b16 %v223
        %v292 = vpack.c.b16 %v285, %v284
        %v293 = vpack.c.b16 %v287, %v286
        %v294 = vpack.c.b16 %v289, %v288
        %v295 = vpack.c.b16 %v291, %v290
        %v300 = vunpack.c.l.b16 %v224
        %v301 = vunpack.c.h.b16 %v224
        %v302 = vunpack.c.l.b16 %v225
        %v303 = vunpack.c.h.b16 %v225
        %v304 = vunpack.c.l.b16 %v226
        %v305 = vunpack.c.h.b16 %v226
        %v306 = vunpack.c.l.b16 %v227
        %v307 = vunpack.c.h.b16 %v227
        %v308 = vpack.c.b16 %v302, %v300
        %v309 = vpack.c.b16 %v303, %v301
        %v310 = vpack.c.b16 %v306, %v304
        %v311 = vpack.c.b16 %v307, %v305
        %vm316 = vcmask 261120
        %v318 = vsel %vm316, %v292, 0
        %v321 = vsel %vm316, %v293, 0
        %v324 = vsel %vm316, %v294, 0
        %v327 = vsel %vm316, %v295, 0
        %329 = vmatprep.subr.bf16.mxu0 0
        %330 = vmatpush1.bf16.msra.mxu0 0
        %331 = vmatprep.subr.bf16.mxu0 0
        %332 = vmatpush1.bf16.msra.mxu0 0
        %333 = vmatprep.subr.bf16.mxu0 0
        %334 = vmatpush1.bf16.msra.mxu0 0
        %335 = vmatprep.subr.bf16.mxu0 0
        %336 = vmatpush1.bf16.msra.mxu0 0
        %337 = vmatprep.subr.bf16.mxu0 0
        %338 = vmatpush1.bf16.msra.mxu0 0
        %339 = vmatprep.subr.bf16.mxu0 0
        %340 = vmatpush1.bf16.msra.mxu0 0
        %341 = vmatprep.subr.bf16.mxu0 %v311
        %342 = vmatpush1.bf16.msra.mxu0 %v310
        %343 = vmatprep.subr.bf16.mxu0 %v309
        %344 = vmatpush1.bf16.msra.mxu0 %v308
        %345 = vmatprep.subr.bf16.mxu0 0
        %346 = vmatpush2.bf16.msra.mxu0 0
        %347 = vmatprep.subr.bf16.mxu0 0
        %348 = vmatpush2.bf16.msra.mxu0 0
        %349 = vmatprep.subr.bf16.mxu0 0
        %350 = vmatpush2.bf16.msra.mxu0 0
        %351 = vmatprep.subr.bf16.mxu0 0
        %352 = vmatpush2.bf16.msra.mxu0 0
        %353 = vmatprep.subr.bf16.mxu0 0
        %354 = vmatpush2.bf16.msra.mxu0 0
        %355 = vmatprep.subr.bf16.mxu0 0
        %356 = vmatpush2.bf16.msra.mxu0 0
        %357 = vmatprep.subr.bf16.mxu0 0
        %358 = vmatpush2.bf16.msra.mxu0 0
        %359 = vmatprep.subr.bf16.mxu0 0
        %360 = vmatpush2.bf16.msra.mxu0 0
        %361 = vmatprep.mubr.bf16.mxu0 0
        %362 = vmatmul.mubr.bf16.gmra.mxu0 %v318
        %v363 = vpop.f32.mrf.mxu0
        %v364 = vadd.f32 %v239, %v363
        %v365 = vpop.f32.mrf.mxu0
        %v366 = vadd.f32 %v239, %v365
        %v367 = vpop.f32.mrf.mxu0
        %v368 = vadd.f32 %v244, %v367
        %v369 = vpop.f32.mrf.mxu0
        %v370 = vadd.f32 %v244, %v369
        %371 = vmatprep.mubr.bf16.mxu0 0
        %372 = vmatmul.mubr.bf16.gmra.mxu0 %v321
        %v373 = vpop.f32.mrf.mxu0
        %v374 = vadd.f32 %v249, %v373
        %v375 = vpop.f32.mrf.mxu0
        %v376 = vadd.f32 %v249, %v375
        %v377 = vpop.f32.mrf.mxu0
        %v378 = vadd.f32 %v254, %v377
        %v379 = vpop.f32.mrf.mxu0
        %v380 = vadd.f32 %v254, %v379
        %381 = vmatprep.mubr.bf16.mxu0 0
        %382 = vmatmul.mubr.bf16.gmra.mxu0 %v324
        %v383 = vpop.f32.mrf.mxu0
        %v384 = vadd.f32 %v259, %v383
        %v385 = vpop.f32.mrf.mxu0
        %v386 = vadd.f32 %v259, %v385
        %v387 = vpop.f32.mrf.mxu0
        %v388 = vadd.f32 %v264, %v387
        %v389 = vpop.f32.mrf.mxu0
        %v390 = vadd.f32 %v264, %v389
        %391 = vmatprep.mubr.bf16.mxu0 0
        %392 = vmatmul.mubr.bf16.gmra.mxu0 %v327
        %v393 = vpop.f32.mrf.mxu0
        %v394 = vadd.f32 %v269, %v393
        %v395 = vpop.f32.mrf.mxu0
        %v396 = vadd.f32 %v269, %v395
        %v397 = vpop.f32.mrf.mxu0
        %v398 = vadd.f32 %v274, %v397
        %v399 = vpop.f32.mrf.mxu0
        %v400 = vadd.f32 %v274, %v399
        %401 = vdwg.mxu0
        %v402 = vmax.f32 %v364, 0.0
        %v403 = vmax.f32 %v366, 0.0
        %v404 = vmax.f32 %v368, 0.0
        %v405 = vmax.f32 %v370, 0.0
        %v406 = vmax.f32 %v374, 0.0
        %v407 = vmax.f32 %v376, 0.0
        %v408 = vmax.f32 %v378, 0.0
        %v409 = vmax.f32 %v380, 0.0
        %v410 = vmax.f32 %v384, 0.0
        %v411 = vmax.f32 %v386, 0.0
        %v412 = vmax.f32 %v388, 0.0
        %v413 = vmax.f32 %v390, 0.0
        %v414 = vmax.f32 %v394, 0.0
        %v415 = vmax.f32 %v396, 0.0
        %v416 = vmax.f32 %v398, 0.0
        %v417 = vmax.f32 %v400, 0.0
        %v418 = vpack.c.bf16 %v404, %v402
        %v419 = vpack.c.bf16 %v405, %v403
        %v420 = vpack.c.bf16 %v408, %v406
        %v421 = vpack.c.bf16 %v409, %v407
        %v422 = vpack.c.bf16 %v412, %v410
        %v423 = vpack.c.bf16 %v413, %v411
        %v424 = vpack.c.bf16 %v416, %v414
        %v425 = vpack.c.bf16 %v417, %v415
        %v434 = vunpack.c.l.b16 %v418
        %v435 = vunpack.c.l.b16 %v419
        %v436 = vunpack.c.h.b16 %v418
        %v437 = vunpack.c.h.b16 %v419
        %v438 = vunpack.c.l.b16 %v420
        %v439 = vunpack.c.l.b16 %v421
        %v440 = vunpack.c.h.b16 %v420
        %v441 = vunpack.c.h.b16 %v421
        %v442 = vunpack.c.l.b16 %v422
        %v443 = vunpack.c.l.b16 %v423
        %v444 = vunpack.c.h.b16 %v422
        %v445 = vunpack.c.h.b16 %v423
        %v446 = vunpack.c.l.b16 %v424
        %v447 = vunpack.c.l.b16 %v425
        %v448 = vunpack.c.h.b16 %v424
        %v449 = vunpack.c.h.b16 %v425
        %v450 = vpack.c.b16 %v435, %v434
        %v451 = vpack.c.b16 %v437, %v436
        %v452 = vpack.c.b16 %v439, %v438
        %v453 = vpack.c.b16 %v441, %v440
        %v454 = vpack.c.b16 %v443, %v442
        %v455 = vpack.c.b16 %v445, %v444
        %v456 = vpack.c.b16 %v447, %v446
        %v457 = vpack.c.b16 %v449, %v448
        %466 = vst [vmem:[%s212] sm:$0xff] %v450
        %467 = vst [vmem:[%s212 + $0x8] sm:$0xff] %v451
        %468 = vst [vmem:[%s212 + $0x10] sm:$0xff] %v452
        %469 = vst [vmem:[%s212 + $0x18] sm:$0xff] %v453
        %470 = vst [vmem:[%s212 + $0x20] sm:$0xff] %v454
        %471 = vst [vmem:[%s212 + $0x28] sm:$0xff] %v455
        %472 = vst [vmem:[%s212 + $0x30] sm:$0xff] %v456
        %473 = vst [vmem:[%s212 + $0x38] sm:$0xff] %v457
        %s474 = sand.u32 %s90, 1
        %s475 = sand.u32 %s90, 1
        %s476 = smul.addr %s475, 64
        %s477 = scalar_lea.vmem [#allocation3], %s476
        // Predicated region
        $region71: #{rootblock_forward.3} parent=65 // pred_check
          %p478 = pneg %p100
        $region72: #{rootblock_forward.3} parent=65 // pred_check_branch
          %480 = sbr.rel (%p478) target = $region74
        $region73: #{rootblock_forward.3} parent=65 // pred_region
          %s481 = smul.u32 2, %s14
          %s482 = smul.addr %s481, 4
          %s483 = scalar_lea.vmem %s3, %s482
          // Predicated region
          $region75: #{rootblock_forward.3} parent=73 // pred_check
            _
          $region76: #{rootblock_forward.3} parent=73 // pred_check_branch
            %485 = sbr.rel (0) target = $region78
          $region77: #{rootblock_forward.3} parent=73 // pred_region
            // Predicated region
            $region79: #{rootblock_forward.3} parent=77 // pred_check
              _
            $region80: #{rootblock_forward.3} parent=77 // pred_check_branch
              %487 = sbr.rel (0) target = $region82
            $region81: #{rootblock_forward.3} parent=77 // pred_region
              // Predicated region
              $region94: #{rootblock_forward.3} parent=81 // pred_check
                _
              $region95: #{rootblock_forward.3} parent=81 // pred_check_branch
                %517 = sbr.rel (0) target = $region97
              $region96: #{rootblock_forward.3} parent=81 // pred_region
                loop: start=0, step=1, limit=1
                $region98: #{rootblock_forward.3} parent=96 // loop_pre_header
                  _
                $region99: #{rootblock_forward.3} parent=96 // loop_header
                  %s519 = sphi 0, %s523
                  %p520 = scmp.ge.s32.totalorder %s519, 1
                  %s524 = sphi %s477, %s477
                  %s525 = sphi %s483, %s483
                $region100: #{rootblock_forward.3} parent=96 // loop_header_branch
                  %522 = sbr.rel (%p520) target = $region104
                $region101: #{rootblock_forward.3} parent=96 // loop_body
                  %v526 = vld [vmem:[%s524] sm:$0xff]
                  %527 = vst [vmem:[%s525] sm:$0xff] %v526
                  %v528 = vld [vmem:[%s524 + $0x8] sm:$0xff]
                  %529 = vst [vmem:[%s525 + $0x10] sm:$0xff] %v528
                  %v530 = vld [vmem:[%s524 + $0x10] sm:$0xff]
                  %531 = vst [vmem:[%s525 + $0x20] sm:$0xff] %v530
                  %v532 = vld [vmem:[%s524 + $0x18] sm:$0xff]
                  %533 = vst [vmem:[%s525 + $0x30] sm:$0xff] %v532
                  %v534 = vld [vmem:[%s524 + $0x20] sm:$0xff]
                  %535 = vst [vmem:[%s525 + $0x40] sm:$0xff] %v534
                  %v536 = vld [vmem:[%s524 + $0x28] sm:$0xff]
                  %537 = vst [vmem:[%s525 + $0x50] sm:$0xff] %v536
                  %v538 = vld [vmem:[%s524 + $0x30] sm:$0xff]
                  %539 = vst [vmem:[%s525 + $0x60] sm:$0xff] %v538
                  %v540 = vld [vmem:[%s524 + $0x38] sm:$0xff]
                  %541 = vst [vmem:[%s525 + $0x70] sm:$0xff] %v540
                $region102: #{rootblock_forward.3} parent=96 // loop_footer
                  %s523 = sadd.s32 1, %s519
                $region103: #{rootblock_forward.3} parent=96 // loop_footer_branch
                  %518 = sbr.rel target = $region99
                $region104: #{rootblock_forward.3} parent=96 // loop_exit
                  _
              $region97: #{rootblock_forward.3} parent=81 // pred_fallthru
                _
              // Predicated region
              $region105: #{rootblock_forward.3} parent=81 // pred_check
                _
              $region106: #{rootblock_forward.3} parent=81 // pred_check_branch
                %543 = sbr.rel target = $region108
              $region107: #{rootblock_forward.3} parent=81 // pred_region
                _
              $region108: #{rootblock_forward.3} parent=81 // pred_fallthru
                _
            $region82: #{rootblock_forward.3} parent=77 // pred_fallthru
              _
            // Predicated region
            $region83: #{rootblock_forward.3} parent=77 // pred_check
              _
            $region84: #{rootblock_forward.3} parent=77 // pred_check_branch
              %489 = sbr.rel target = $region86
            $region85: #{rootblock_forward.3} parent=77 // pred_region
              %s491 = ssub.s32 256, 1
              loop: start=0, step=1, limit=1
              $region87: #{rootblock_forward.3} parent=85 // loop_pre_header
                _
              $region88: #{rootblock_forward.3} parent=85 // loop_header
                %s493 = sphi 0, %s497
                %p494 = scmp.ge.s32.totalorder %s493, 1
                %s498 = sphi %s477, %s477
                %s499 = sphi %s483, %s483
              $region89: #{rootblock_forward.3} parent=85 // loop_header_branch
                %496 = sbr.rel (%p494) target = $region93
              $region90: #{rootblock_forward.3} parent=85 // loop_body
                %v500 = vld [vmem:[%s498] sm:%s491]
                %501 = vst [vmem:[%s499] sm:%s491] %v500
                %v502 = vld [vmem:[%s498 + $0x8] sm:%s491]
                %503 = vst [vmem:[%s499 + $0x10] sm:%s491] %v502
                %v504 = vld [vmem:[%s498 + $0x10] sm:%s491]
                %505 = vst [vmem:[%s499 + $0x20] sm:%s491] %v504
                %v506 = vld [vmem:[%s498 + $0x18] sm:%s491]
                %507 = vst [vmem:[%s499 + $0x30] sm:%s491] %v506
                %v508 = vld [vmem:[%s498 + $0x20] sm:%s491]
                %509 = vst [vmem:[%s499 + $0x40] sm:%s491] %v508
                %v510 = vld [vmem:[%s498 + $0x28] sm:%s491]
                %511 = vst [vmem:[%s499 + $0x50] sm:%s491] %v510
                %v512 = vld [vmem:[%s498 + $0x30] sm:%s491]
                %513 = vst [vmem:[%s499 + $0x60] sm:%s491] %v512
                %v514 = vld [vmem:[%s498 + $0x38] sm:%s491]
                %515 = vst [vmem:[%s499 + $0x70] sm:%s491] %v514
              $region91: #{rootblock_forward.3} parent=85 // loop_footer
                %s497 = sadd.s32 1, %s493
              $region92: #{rootblock_forward.3} parent=85 // loop_footer_branch
                %492 = sbr.rel target = $region88
              $region93: #{rootblock_forward.3} parent=85 // loop_exit
                _
            $region86: #{rootblock_forward.3} parent=77 // pred_fallthru
              _
          $region78: #{rootblock_forward.3} parent=73 // pred_fallthru
            _
          %544 = vnop
        $region74: #{rootblock_forward.3} parent=65 // pred_fallthru
          _
      $region66: #{rootblock_forward.3} parent=5 // pred_fallthru
        _
      %p545 = scmp.le.s32.totalorder 2, %s9
      // Predicated region
      $region109: #{rootblock_forward.3} parent=5 // pred_check
        %p546 = pneg %p545
      $region110: #{rootblock_forward.3} parent=5 // pred_check_branch
        %548 = sbr.rel (%p546) target = $region112
      $region111: #{rootblock_forward.3} parent=5 // pred_region
        %s549 = ssub.s32 %s9, 2
        // Predicated region
        $region113: #{rootblock_forward.3} parent=111 // pred_check
          %p550 = pneg %p106
        $region114: #{rootblock_forward.3} parent=111 // pred_check_branch
          %552 = sbr.rel (%p550) target = $region116
        $region115: #{rootblock_forward.3} parent=111 // pred_region
          %s553 = sand.u32 %s91, 1
          %s554 = sand.u32 %s91, 1
          %s555 = smul.addr %s554, 64
          %s556 = scalar_lea.vmem [#allocation3], %s555
        $region116: #{rootblock_forward.3} parent=111 // pred_fallthru
          _
      $region112: #{rootblock_forward.3} parent=5 // pred_fallthru
        _
    $region6: #{rootblock_forward.3} parent=1 // loop_footer
      %s13 = sadd.s32 1, %s9
    $region7: #{rootblock_forward.3} parent=1 // loop_footer_branch
      %8 = sbr.rel target = $region3
    $region8: #{rootblock_forward.3} parent=1 // loop_exit
      _

// kernel: rootblock_forward.2
$region0: #{rootblock_forward.2}
  #allocation0 [shape = 'u32[]', space=smem, size = 0x4, offset = 0x4, fixed_abs, tag = 'smem constant byte address 0x4 - core index']
  #allocation1 [shape = 'u32[144,128]{1,0:T(1,128)}', space=vmem, size = 0x12000, scoped, tag = 'internal scratch']
  %s0 = inlined_call_operand.vmem [shape: bf16[32,512], index: 0, kind: input, shape index: {}]
  %s1 = inlined_call_operand.vmem [shape: bf16[64,32], index: 1, kind: input, shape index: {}]
  %s2 = inlined_call_operand.vmem [shape: f32[2,64,1], index: 2, kind: output, shape index: {0}]
  %s3 = inlined_call_operand.vmem [shape: f32[2,64,1], index: 3, kind: output, shape index: {1}]
  %4 = xla_tuple %s2, %s3
  %s5 = sld [smem:[#allocation0]]
  $region87: #{rootblock_forward.2} parent=0
    _
  %s7 = ssub.s32 1, %s5
  %s8 = scalar_select 0, %s7, %s5
  $region1: #{rootblock_forward.2} parent=0
    #allocation2 [shape = 'u8[32768]{0}', space=vmem, size = 0x8000, scoped, tag = 'input window, operand 0']
    loop: start=0, step=1, limit=4
    $region2: #{rootblock_forward.2} parent=1 // loop_pre_header
      _
    $region3: #{rootblock_forward.2} parent=1 // loop_header
      %s10 = sphi 0, %s14
      %p11 = scmp.ge.s32.totalorder %s10, 4
      %s20 = sphi 0, %s22
      %s23 = sphi 0, %s20
      %s24 = sphi 0, %s23
      %s40 = sphi 0, %s24
      %s44 = sphi 0, %s44
      %s46 = sphi 0, %s44
      %s47 = sphi 0, %s46
      %s61 = sphi 0, %s47
      %s67 = sphi 0, %s69
      %s70 = sphi 0, %s67
      %s71 = sphi 0, %s70
      %s87 = sphi 0, %s71
      %s93 = sphi 0, %s95
      %s96 = sphi 0, %s93
      %s97 = sphi 0, %s96
      %s113 = sphi 0, %s97
    $region4: #{rootblock_forward.2} parent=1 // loop_header_branch
      %13 = sbr.rel (%p11) target = $region8
    $region5: #{rootblock_forward.2} parent=1 // loop_body
      %s15 = ssub.s32 %s10, 1
      %s16 = ssub.s32 %s10, 2
      %s17 = sadd.s32 %s10, 1
      %s18 = ssub.s32 %s10, %s17
      %p19 = scmp.eq.s32.totalorder %s18, 0
      %s21 = sadd.s32 %s20, 1
      %s22 = scalar_select %p19, %s20, %s21
      %p25 = pneg %p19
      %p26 = scmp.eq.s32.totalorder %s10, 1
      %p27 = por %p25, %p26
      %p28 = scmp.ne.s32.totalorder %s20, %s23
      %p29 = scmp.eq.s32.totalorder %s10, 0
      %p30 = por %p28, %p29
      %p31 = scmp.ne.s32.totalorder %s20, %s23
      %p32 = scmp.eq.s32.totalorder %s15, 1
      %p33 = por %p31, %p32
      %p34 = scmp.ne.s32.totalorder %s23, %s24
      %p35 = scmp.eq.s32.totalorder %s15, 0
      %p36 = por %p34, %p35
      %p37 = scmp.ne.s32.totalorder %s23, %s24
      %p38 = scmp.eq.s32.totalorder %s16, 1
      %p39 = por %p37, %p38
      %p41 = scmp.ne.s32.totalorder %s24, %s40
      %p42 = scmp.eq.s32.totalorder %s16, 0
      %p43 = por %p41, %p42
      %s45 = sadd.s32 %s44, 1
      %p48 = scmp.eq.s32.totalorder %s10, 1
      %p49 = scmp.ne.s32.totalorder %s44, %s46
      %p50 = scmp.eq.s32.totalorder %s10, 0
      %p51 = por %p49, %p50
      %p52 = scmp.ne.s32.totalorder %s44, %s46
      %p53 = scmp.eq.s32.totalorder %s15, 1
      %p54 = por %p52, %p53
      %p55 = scmp.ne.s32.totalorder %s46, %s47
      %p56 = scmp.eq.s32.totalorder %s15, 0
      %p57 = por %p55, %p56
      %p58 = scmp.ne.s32.totalorder %s46, %s47
      %p59 = scmp.eq.s32.totalorder %s16, 1
      %p60 = por %p58, %p59
      %p62 = scmp.ne.s32.totalorder %s47, %s61
      %p63 = scmp.eq.s32.totalorder %s16, 0
      %p64 = por %p62, %p63
      %s65 = ssub.s32 %s10, %s17
      %p66 = scmp.eq.s32.totalorder %s65, 0
      %s68 = sadd.s32 %s67, 1
      %s69 = scalar_select %p66, %s67, %s68
      %p72 = pneg %p66
      %p73 = scmp.eq.s32.totalorder %s10, 1
      %p74 = por %p72, %p73
      %p75 = scmp.ne.s32.totalorder %s67, %s70
      %p76 = scmp.eq.s32.totalorder %s10, 0
      %p77 = por %p75, %p76
      %p78 = scmp.ne.s32.totalorder %s67, %s70
      %p79 = scmp.eq.s32.totalorder %s15, 1
      %p80 = por %p78, %p79
      %p81 = scmp.ne.s32.totalorder %s70, %s71
      %p82 = scmp.eq.s32.totalorder %s15, 0
      %p83 = por %p81, %p82
      %p84 = scmp.ne.s32.totalorder %s70, %s71
      %p85 = scmp.eq.s32.totalorder %s16, 1
      %p86 = por %p84, %p85
      %p88 = scmp.ne.s32.totalorder %s71, %s87
      %p89 = scmp.eq.s32.totalorder %s16, 0
      %p90 = por %p88, %p89
      %s91 = ssub.s32 %s10, %s17
      %p92 = scmp.eq.s32.totalorder %s91, 0
      %s94 = sadd.s32 %s93, 1
      %s95 = scalar_select %p92, %s93, %s94
      %p98 = pneg %p92
      %p99 = scmp.eq.s32.totalorder %s10, 1
      %p100 = por %p98, %p99
      %p101 = scmp.ne.s32.totalorder %s93, %s96
      %p102 = scmp.eq.s32.totalorder %s10, 0
      %p103 = por %p101, %p102
      %p104 = scmp.ne.s32.totalorder %s93, %s96
      %p105 = scmp.eq.s32.totalorder %s15, 1
      %p106 = por %p104, %p105
      %p107 = scmp.ne.s32.totalorder %s96, %s97
      %p108 = scmp.eq.s32.totalorder %s15, 0
      %p109 = por %p107, %p108
      %p110 = scmp.ne.s32.totalorder %s96, %s97
      %p111 = scmp.eq.s32.totalorder %s16, 1
      %p112 = por %p110, %p111
      %p114 = scmp.ne.s32.totalorder %s97, %s113
      %p115 = scmp.eq.s32.totalorder %s16, 0
      %p116 = por %p114, %p115
      %p117 = scmp.le.s32.totalorder 1, %s10
      %p118 = scmp.lt.s32.totalorder %s10, 3
      %p119 = pnand %p117, %p118
      %p120 = pneg %p119
      // Predicated region
      $region9: #{rootblock_forward.2} parent=5 // pred_check
        _
      $region10: #{rootblock_forward.2} parent=5 // pred_check_branch
        %122 = sbr.rel (%p119) target = $region12
      $region11: #{rootblock_forward.2} parent=5 // pred_region
        %s123 = ssub.s32 %s10, 1
        // Predicated region
        $region13: #{rootblock_forward.2} parent=11 // pred_check
          %p124 = pneg %p57
        $region14: #{rootblock_forward.2} parent=11 // pred_check_branch
          %126 = sbr.rel (%p124) target = $region16
        $region15: #{rootblock_forward.2} parent=11 // pred_region
          _
        $region16: #{rootblock_forward.2} parent=11 // pred_fallthru
          _
      $region12: #{rootblock_forward.2} parent=5 // pred_fallthru
        _
      %p127 = scmp.lt.s32.totalorder %s10, 2
      // Predicated region
      $region17: #{rootblock_forward.2} parent=5 // pred_check
        %p128 = pneg %p127
      $region18: #{rootblock_forward.2} parent=5 // pred_check_branch
        %130 = sbr.rel (%p128) target = $region20
      $region19: #{rootblock_forward.2} parent=5 // pred_region
        // Predicated region
        $region21: #{rootblock_forward.2} parent=19 // pred_check
          %p131 = pneg %p30
        $region22: #{rootblock_forward.2} parent=19 // pred_check_branch
          %133 = sbr.rel (%p131) target = $region24
        $region23: #{rootblock_forward.2} parent=19 // pred_region
          %s134 = sand.u32 %s20, 1
          %s135 = sand.u32 %s20, 1
          %s136 = smul.addr %s135, 32
          %s137 = scalar_lea.vmem [#allocation2], %s136
          %s138 = smul.u32 2, %s10
          %s139 = smul.addr %s138, 4
          %s140 = scalar_lea.vmem %s0, %s139
          // Predicated region
          $region25: #{rootblock_forward.2} parent=23 // pred_check
            _
          $region26: #{rootblock_forward.2} parent=23 // pred_check_branch
            %142 = sbr.rel (0) target = $region28
          $region27: #{rootblock_forward.2} parent=23 // pred_region
            // Predicated region
            $region29: #{rootblock_forward.2} parent=27 // pred_check
              _
            $region30: #{rootblock_forward.2} parent=27 // pred_check_branch
              %144 = sbr.rel (0) target = $region32
            $region31: #{rootblock_forward.2} parent=27 // pred_region
              // Predicated region
              $region44: #{rootblock_forward.2} parent=31 // pred_check
                _
              $region45: #{rootblock_forward.2} parent=31 // pred_check_branch
                %166 = sbr.rel (0) target = $region47
              $region46: #{rootblock_forward.2} parent=31 // pred_region
                loop: start=0, step=1, limit=1
                $region48: #{rootblock_forward.2} parent=46 // loop_pre_header
                  _
                $region49: #{rootblock_forward.2} parent=46 // loop_header
                  %s168 = sphi 0, %s172
                  %p169 = scmp.ge.s32.totalorder %s168, 1
                  %s173 = sphi %s140, %s140
                  %s174 = sphi %s137, %s137
                $region50: #{rootblock_forward.2} parent=46 // loop_header_branch
                  %171 = sbr.rel (%p169) target = $region54
                $region51: #{rootblock_forward.2} parent=46 // loop_body
                  %v175 = vld [vmem:[%s173] sm:$0xff]
                  %176 = vst [vmem:[%s174] sm:$0xff] %v175
                  %v177 = vld [vmem:[%s173 + $0x10] sm:$0xff]
                  %178 = vst [vmem:[%s174 + $0x8] sm:$0xff] %v177
                  %v179 = vld [vmem:[%s173 + $0x20] sm:$0xff]
                  %180 = vst [vmem:[%s174 + $0x10] sm:$0xff] %v179
                  %v181 = vld [vmem:[%s173 + $0x30] sm:$0xff]
                  %182 = vst [vmem:[%s174 + $0x18] sm:$0xff] %v181
                $region52: #{rootblock_forward.2} parent=46 // loop_footer
                  %s172 = sadd.s32 1, %s168
                $region53: #{rootblock_forward.2} parent=46 // loop_footer_branch
                  %167 = sbr.rel target = $region49
                $region54: #{rootblock_forward.2} parent=46 // loop_exit
                  _
              $region47: #{rootblock_forward.2} parent=31 // pred_fallthru
                _
              // Predicated region
              $region55: #{rootblock_forward.2} parent=31 // pred_check
                _
              $region56: #{rootblock_forward.2} parent=31 // pred_check_branch
                %184 = sbr.rel target = $region58
              $region57: #{rootblock_forward.2} parent=31 // pred_region
                _
              $region58: #{rootblock_forward.2} parent=31 // pred_fallthru
                _
            $region32: #{rootblock_forward.2} parent=27 // pred_fallthru
              _
            // Predicated region
            $region33: #{rootblock_forward.2} parent=27 // pred_check
              _
            $region34: #{rootblock_forward.2} parent=27 // pred_check_branch
              %146 = sbr.rel target = $region36
            $region35: #{rootblock_forward.2} parent=27 // pred_region
              %s148 = ssub.s32 256, 1
              loop: start=0, step=1, limit=1
              $region37: #{rootblock_forward.2} parent=35 // loop_pre_header
                _
              $region38: #{rootblock_forward.2} parent=35 // loop_header
                %s150 = sphi 0, %s154
                %p151 = scmp.ge.s32.totalorder %s150, 1
                %s155 = sphi %s140, %s140
                %s156 = sphi %s137, %s137
              $region39: #{rootblock_forward.2} parent=35 // loop_header_branch
                %153 = sbr.rel (%p151) target = $region43
              $region40: #{rootblock_forward.2} parent=35 // loop_body
                %v157 = vld [vmem:[%s155] sm:%s148]
                %158 = vst [vmem:[%s156] sm:%s148] %v157
                %v159 = vld [vmem:[%s155 + $0x10] sm:%s148]
                %160 = vst [vmem:[%s156 + $0x8] sm:%s148] %v159
                %v161 = vld [vmem:[%s155 + $0x20] sm:%s148]
                %162 = vst [vmem:[%s156 + $0x10] sm:%s148] %v161
                %v163 = vld [vmem:[%s155 + $0x30] sm:%s148]
                %164 = vst [vmem:[%s156 + $0x18] sm:%s148] %v163
              $region41: #{rootblock_forward.2} parent=35 // loop_footer
                %s154 = sadd.s32 1, %s150
              $region42: #{rootblock_forward.2} parent=35 // loop_footer_branch
                %149 = sbr.rel target = $region38
              $region43: #{rootblock_forward.2} parent=35 // loop_exit
                _
            $region36: #{rootblock_forward.2} parent=27 // pred_fallthru
              _
          $region28: #{rootblock_forward.2} parent=23 // pred_fallthru
            _
          %185 = vnop
        $region24: #{rootblock_forward.2} parent=19 // pred_fallthru
          _
      $region20: #{rootblock_forward.2} parent=5 // pred_fallthru
        _
      %p186 = scmp.le.s32.totalorder 1, %s10
      %p187 = scmp.lt.s32.totalorder %s10, 3
      %p188 = pnand %p186, %p187
      %p189 = pneg %p188
      // Predicated region
      $region59: #{rootblock_forward.2} parent=5 // pred_check
        _
      $region60: #{rootblock_forward.2} parent=5 // pred_check_branch
        %191 = sbr.rel (%p188) target = $region62
      $region61: #{rootblock_forward.2} parent=5 // pred_region
        %s192 = ssub.s32 %s10, 1
        %s193 = sand.u32 %s23, 1
        %s194 = sand.u32 %s23, 1
        %s195 = smul.addr %s194, 32
        %s196 = scalar_lea.vmem [#allocation2], %s195
        // Predicated region
        $region63: #{rootblock_forward.2} parent=61 // pred_check
          %p197 = pneg %p36
        $region64: #{rootblock_forward.2} parent=61 // pred_check_branch
          %199 = sbr.rel (%p197) target = $region66
        $region65: #{rootblock_forward.2} parent=61 // pred_region
          _
        $region66: #{rootblock_forward.2} parent=61 // pred_fallthru
          _
        %s200 = sand.u32 %s23, 1
        %s201 = sand.u32 %s23, 1
        %s202 = smul.addr %s201, 32
        %s203 = scalar_lea.vmem [#allocation2], %s202
        %p204 = pneg %p36
        %p205 = pneg %p33
        %p206 = pneg %p57
        %p207 = pneg %p54
        %p208 = pneg %p83
        %p209 = pneg %p80
        %p210 = scmp.lt.s32.totalorder %s15, 1
        %s211 = scalar_select %p210, %s15, 1
        %s212 = smul.addr %s211, 8
        %s213 = smul.addr %s212, 8
        %s214 = scalar_lea.vmem %s2, %s213
        %p215 = pneg %p109
        %p216 = pneg %p106
        %p217 = scmp.lt.s32.totalorder %s15, 1
        %s218 = scalar_select %p217, %s15, 1
        %s219 = smul.addr %s218, 8
        %s220 = smul.addr %s219, 8
        %s221 = scalar_lea.vmem %s3, %s220
        %s222 = smul.u32 2, %s15
        %p223 = scmp.lt.s32.totalorder %s15, 1
        %s224 = scalar_select %p223, %s15, 1
        %s225 = smul.addr %s224, 8
        %s226 = smul.addr %s225, 8
        %s227 = scalar_lea.vmem %s2, %s226
        %p228 = scmp.lt.s32.totalorder %s15, 1
        %s229 = scalar_select %p228, %s15, 1
        %s230 = smul.addr %s229, 8
        %s231 = smul.addr %s230, 8
        %s232 = scalar_lea.vmem %s3, %s231
        %v234 = vld [vmem:[%s1] sm:$0xf]
        %v235 = vld [vmem:[%s1 + $0x4] sm:$0xf]
        %v236 = vld [vmem:[%s1 + $0x8] sm:$0xf]
        %v237 = vld [vmem:[%s1 + $0xc] sm:$0xf]
        %v238 = vld [vmem:[%s1 + $0x10] sm:$0xf]
        %v239 = vld [vmem:[%s1 + $0x14] sm:$0xf]
        %v240 = vld [vmem:[%s1 + $0x18] sm:$0xf]
        %v241 = vld [vmem:[%s1 + $0x1c] sm:$0xf]
        %v242 = vld [vmem:[%s196] sm:$0xff]
        %v243 = vld [vmem:[%s196 + $0x8] sm:$0xff]
        %v244 = vld [vmem:[%s196 + $0x10] sm:$0xff]
        %v245 = vld [vmem:[%s196 + $0x18] sm:$0xff]
        %v254 = vunpack.c.l.b16 %v234
        %v255 = vunpack.c.l.b16 %v235
        %v256 = vunpack.c.l.b16 %v236
        %v257 = vunpack.c.l.b16 %v237
        %v258 = vunpack.c.l.b16 %v238
        %v259 = vunpack.c.l.b16 %v239
        %v260 = vunpack.c.l.b16 %v240
        %v261 = vunpack.c.l.b16 %v241
        %v262 = vpack.c.b16 %v255, %v254
        %v263 = vpack.c.b16 %v257, %v256
        %v264 = vpack.c.b16 %v259, %v258
        %v265 = vpack.c.b16 %v261, %v260
        %v270 = vunpack.c.l.b16 %v242
        %v271 = vunpack.c.h.b16 %v242
        %v272 = vunpack.c.l.b16 %v243
        %v273 = vunpack.c.h.b16 %v243
        %v274 = vunpack.c.l.b16 %v244
        %v275 = vunpack.c.h.b16 %v244
        %v276 = vunpack.c.l.b16 %v245
        %v277 = vunpack.c.h.b16 %v245
        %v278 = vpack.c.b16 %v272, %v270
        %v279 = vpack.c.b16 %v273, %v271
        %v280 = vpack.c.b16 %v276, %v274
        %v281 = vpack.c.b16 %v277, %v275
        %vm286 = vcmask 261120
        %v288 = vsel %vm286, %v262, 0
        %v291 = vsel %vm286, %v263, 0
        %v294 = vsel %vm286, %v264, 0
        %v297 = vsel %vm286, %v265, 0
        %299 = vmatprep.subr.bf16.mxu0 0
        %300 = vmatpush1.bf16.msra.mxu0 0
        %301 = vmatprep.subr.bf16.mxu0 0
        %302 = vmatpush1.bf16.msra.mxu0 0
        %303 = vmatprep.subr.bf16.mxu0 0
        %304 = vmatpush1.bf16.msra.mxu0 0
        %305 = vmatprep.subr.bf16.mxu0 0
        %306 = vmatpush1.bf16.msra.mxu0 0
        %307 = vmatprep.subr.bf16.mxu0 0
        %308 = vmatpush1.bf16.msra.mxu0 0
        %309 = vmatprep.subr.bf16.mxu0 0
        %310 = vmatpush1.bf16.msra.mxu0 0
        %311 = vmatprep.subr.bf16.mxu0 %v281
        %312 = vmatpush1.bf16.msra.mxu0 %v280
        %313 = vmatprep.subr.bf16.mxu0 %v279
        %314 = vmatpush1.bf16.msra.mxu0 %v278
        %315 = vmatprep.subr.bf16.mxu0 0
        %316 = vmatpush2.bf16.msra.mxu0 0
        %317 = vmatprep.subr.bf16.mxu0 0
        %318 = vmatpush2.bf16.msra.mxu0 0
        %319 = vmatprep.subr.bf16.mxu0 0
        %320 = vmatpush2.bf16.msra.mxu0 0
        %321 = vmatprep.subr.bf16.mxu0 0
        %322 = vmatpush2.bf16.msra.mxu0 0
        %323 = vmatprep.subr.bf16.mxu0 0
        %324 = vmatpush2.bf16.msra.mxu0 0
        %325 = vmatprep.subr.bf16.mxu0 0
        %326 = vmatpush2.bf16.msra.mxu0 0
        %327 = vmatprep.subr.bf16.mxu0 0
        %328 = vmatpush2.bf16.msra.mxu0 0
        %329 = vmatprep.subr.bf16.mxu0 0
        %330 = vmatpush2.bf16.msra.mxu0 0
        %331 = vmatprep.mubr.bf16.mxu0 0
        %332 = vmatmul.mubr.bf16.gmra.mxu0 %v288
        %v333 = vpop.f32.mrf.mxu0
        %v334 = vadd.f32 0.0, %v333
        %v335 = vpop.f32.mrf.mxu0
        %v336 = vadd.f32 0.0, %v335
        %v337 = vpop.f32.mrf.mxu0
        %v338 = vadd.f32 0.0, %v337
        %v339 = vpop.f32.mrf.mxu0
        %v340 = vadd.f32 0.0, %v339
        %341 = vmatprep.mubr.bf16.mxu0 0
        %342 = vmatmul.mubr.bf16.gmra.mxu0 %v291
        %v343 = vpop.f32.mrf.mxu0
        %v344 = vadd.f32 0.0, %v343
        %v345 = vpop.f32.mrf.mxu0
        %v346 = vadd.f32 0.0, %v345
        %v347 = vpop.f32.mrf.mxu0
        %v348 = vadd.f32 0.0, %v347
        %v349 = vpop.f32.mrf.mxu0
        %v350 = vadd.f32 0.0, %v349
        %351 = vmatprep.mubr.bf16.mxu0 0
        %352 = vmatmul.mubr.bf16.gmra.mxu0 %v294
        %v353 = vpop.f32.mrf.mxu0
        %v354 = vadd.f32 0.0, %v353
        %v355 = vpop.f32.mrf.mxu0
        %v356 = vadd.f32 0.0, %v355
        %v357 = vpop.f32.mrf.mxu0
        %v358 = vadd.f32 0.0, %v357
        %v359 = vpop.f32.mrf.mxu0
        %v360 = vadd.f32 0.0, %v359
        %361 = vmatprep.mubr.bf16.mxu0 0
        %362 = vmatmul.mubr.bf16.gmra.mxu0 %v297
        %v363 = vpop.f32.mrf.mxu0
        %v364 = vadd.f32 0.0, %v363
        %v365 = vpop.f32.mrf.mxu0
        %v366 = vadd.f32 0.0, %v365
        %v367 = vpop.f32.mrf.mxu0
        %v368 = vadd.f32 0.0, %v367
        %v369 = vpop.f32.mrf.mxu0
        %v370 = vadd.f32 0.0, %v369
        %371 = vdwg.mxu0
        %v372 = vadd.f32 %v334, %v336
        %373 = vadd.xlane.f32.xlu0 %v372
        %v374 = vpop.xlane.xlu0 %373
        %v375 = vadd.f32 %v338, %v340
        %376 = vadd.xlane.f32.xlu0 %v375
        %v377 = vpop.xlane.xlu0 %376
        %v378 = vadd.f32 %v344, %v346
        %379 = vadd.xlane.f32.xlu0 %v378
        %v380 = vpop.xlane.xlu0 %379
        %v381 = vadd.f32 %v348, %v350
        %382 = vadd.xlane.f32.xlu0 %v381
        %v383 = vpop.xlane.xlu0 %382
        %v384 = vadd.f32 %v354, %v356
        %385 = vadd.xlane.f32.xlu0 %v384
        %v386 = vpop.xlane.xlu0 %385
        %v387 = vadd.f32 %v358, %v360
        %388 = vadd.xlane.f32.xlu0 %v387
        %v389 = vpop.xlane.xlu0 %388
        %v390 = vadd.f32 %v364, %v366
        %391 = vadd.xlane.f32.xlu0 %v390
        %v392 = vpop.xlane.xlu0 %391
        %v393 = vadd.f32 %v368, %v370
        %394 = vadd.xlane.f32.xlu0 %v393
        %v395 = vpop.xlane.xlu0 %394
        %vm396 = vcmask 7168
        %397 = vst.msk [vmem:[%s227] sm:$0xff] %vm396, %v374
        %398 = vst.msk [vmem:[%s227 + $0x8] sm:$0xff] %vm396, %v377
        %399 = vst.msk [vmem:[%s227 + $0x10] sm:$0xff] %vm396, %v380
        %400 = vst.msk [vmem:[%s227 + $0x18] sm:$0xff] %vm396, %v383
        %401 = vst.msk [vmem:[%s227 + $0x20] sm:$0xff] %vm396, %v386
        %402 = vst.msk [vmem:[%s227 + $0x28] sm:$0xff] %vm396, %v389
        %403 = vst.msk [vmem:[%s227 + $0x30] sm:$0xff] %vm396, %v392
        %404 = vst.msk [vmem:[%s227 + $0x38] sm:$0xff] %vm396, %v395
        %v405 = vmul.f32 %v334, %v334
        %v406 = vmul.f32 %v336, %v336
        %v407 = vmul.f32 %v338, %v338
        %v408 = vmul.f32 %v340, %v340
        %v409 = vmul.f32 %v344, %v344
        %v410 = vmul.f32 %v346, %v346
        %v411 = vmul.f32 %v348, %v348
        %v412 = vmul.f32 %v350, %v350
        %v413 = vmul.f32 %v354, %v354
        %v414 = vmul.f32 %v356, %v356
        %v415 = vmul.f32 %v358, %v358
        %v416 = vmul.f32 %v360, %v360
        %v417 = vmul.f32 %v364, %v364
        %v418 = vmul.f32 %v366, %v366
        %v419 = vmul.f32 %v368, %v368
        %v420 = vmul.f32 %v370, %v370
        %v421 = vadd.f32 %v405, %v406
        %422 = vadd.xlane.f32.xlu0 %v421
        %v423 = vpop.xlane.xlu0 %422
        %v424 = vadd.f32 %v407, %v408
        %425 = vadd.xlane.f32.xlu0 %v424
        %v426 = vpop.xlane.xlu0 %425
        %v427 = vadd.f32 %v409, %v410
        %428 = vadd.xlane.f32.xlu0 %v427
        %v429 = vpop.xlane.xlu0 %428
        %v430 = vadd.f32 %v411, %v412
        %431 = vadd.xlane.f32.xlu0 %v430
        %v432 = vpop.xlane.xlu0 %431
        %v433 = vadd.f32 %v413, %v414
        %434 = vadd.xlane.f32.xlu0 %v433
        %v435 = vpop.xlane.xlu0 %434
        %v436 = vadd.f32 %v415, %v416
        %437 = vadd.xlane.f32.xlu0 %v436
        %v438 = vpop.xlane.xlu0 %437
        %v439 = vadd.f32 %v417, %v418
        %440 = vadd.xlane.f32.xlu0 %v439
        %v441 = vpop.xlane.xlu0 %440
        %v442 = vadd.f32 %v419, %v420
        %443 = vadd.xlane.f32.xlu0 %v442
        %v444 = vpop.xlane.xlu0 %443
        %445 = vst.msk [vmem:[%s232] sm:$0xff] %vm396, %v423
        %446 = vst.msk [vmem:[%s232 + $0x8] sm:$0xff] %vm396, %v426
        %447 = vst.msk [vmem:[%s232 + $0x10] sm:$0xff] %vm396, %v429
        %448 = vst.msk [vmem:[%s232 + $0x18] sm:$0xff] %vm396, %v432
        %449 = vst.msk [vmem:[%s232 + $0x20] sm:$0xff] %vm396, %v435
        %450 = vst.msk [vmem:[%s232 + $0x28] sm:$0xff] %vm396, %v438
        %451 = vst.msk [vmem:[%s232 + $0x30] sm:$0xff] %vm396, %v441
        %452 = vst.msk [vmem:[%s232 + $0x38] sm:$0xff] %vm396, %v444
        %p453 = scmp.lt.s32.totalorder %s15, 1
        %s454 = scalar_select %p453, %s15, 1
        %s455 = smul.addr %s454, 8
        %s456 = smul.addr %s455, 8
        %s457 = scalar_lea.vmem %s2, %s456
        %p458 = scmp.lt.s32.totalorder %s15, 1
        %s459 = scalar_select %p458, %s15, 1
        %s460 = smul.addr %s459, 8
        %s461 = smul.addr %s460, 8
        %s462 = scalar_lea.vmem %s3, %s461
        // Predicated region
        $region67: #{rootblock_forward.2} parent=61 // pred_check
          %p463 = pneg %p80
        $region68: #{rootblock_forward.2} parent=61 // pred_check_branch
          %465 = sbr.rel (%p463) target = $region70
        $region69: #{rootblock_forward.2} parent=61 // pred_region
          _
        $region70: #{rootblock_forward.2} parent=61 // pred_fallthru
          _
        // Predicated region
        $region71: #{rootblock_forward.2} parent=61 // pred_check
          %p466 = pneg %p106
        $region72: #{rootblock_forward.2} parent=61 // pred_check_branch
          %468 = sbr.rel (%p466) target = $region74
        $region73: #{rootblock_forward.2} parent=61 // pred_region
          _
        $region74: #{rootblock_forward.2} parent=61 // pred_fallthru
          _
      $region62: #{rootblock_forward.2} parent=5 // pred_fallthru
        _
      %p469 = scmp.le.s32.totalorder 2, %s10
      // Predicated region
      $region75: #{rootblock_forward.2} parent=5 // pred_check
        %p470 = pneg %p469
      $region76: #{rootblock_forward.2} parent=5 // pred_check_branch
        %472 = sbr.rel (%p470) target = $region78
      $region77: #{rootblock_forward.2} parent=5 // pred_region
        %s473 = ssub.s32 %s10, 2
        // Predicated region
        $region79: #{rootblock_forward.2} parent=77 // pred_check
          %p474 = pneg %p86
        $region80: #{rootblock_forward.2} parent=77 // pred_check_branch
          %476 = sbr.rel (%p474) target = $region82
        $region81: #{rootblock_forward.2} parent=77 // pred_region
          %p477 = scmp.lt.s32.totalorder %s16, 1
          %s478 = scalar_select %p477, %s16, 1
          %s479 = smul.addr %s478, 8
          %s480 = smul.addr %s479, 8
          %s481 = scalar_lea.vmem %s2, %s480
        $region82: #{rootblock_forward.2} parent=77 // pred_fallthru
          _
        // Predicated region
        $region83: #{rootblock_forward.2} parent=77 // pred_check
          %p482 = pneg %p112
        $region84: #{rootblock_forward.2} parent=77 // pred_check_branch
          %484 = sbr.rel (%p482) target = $region86
        $region85: #{rootblock_forward.2} parent=77 // pred_region
          %p485 = scmp.lt.s32.totalorder %s16, 1
          %s486 = scalar_select %p485, %s16, 1
          %s487 = smul.addr %s486, 8
          %s488 = smul.addr %s487, 8
          %s489 = scalar_lea.vmem %s3, %s488
        $region86: #{rootblock_forward.2} parent=77 // pred_fallthru
          _
      $region78: #{rootblock_forward.2} parent=5 // pred_fallthru
        _
    $region6: #{rootblock_forward.2} parent=1 // loop_footer
      %s14 = sadd.s32 1, %s10
    $region7: #{rootblock_forward.2} parent=1 // loop_footer_branch
      %9 = sbr.rel target = $region3
    $region8: #{rootblock_forward.2} parent=1 // loop_exit
      _

</llo_original>
